<compile_context>
chip_gen: v6e
topology: v6e:2x2x1
jax: 0.10.0
libtpu: 0.0.40
codegen_flags: <defaults>
</compile_context>

<pallas_src>
import functools

import jax
import jax.numpy as jnp
from jax.experimental import pallas as pl
from jax.experimental.pallas import tpu as pltpu


def _rmsnorm_kernel(x_ref, w_ref, o_ref, *, eps):
    """One (block_rows, dim) tile.  Rows are independent; the feature axis is
    always a full-extent block, so a ragged last row-block is safe (OOB-read
    padding rows produce garbage that Pallas masks on the store)."""
    x = x_ref[...]                                        # (block_rows, dim)
    xf = x.astype(jnp.float32)
    dim = x.shape[-1]
    # norm = L2 norm over last axis * dim**-0.5 == sqrt(mean(x^2));
    # eps is added OUTSIDE the sqrt to match the PyTorch module exactly.
    sq_sum = jnp.sum(xf * xf, axis=-1, keepdims=True)     # (block_rows, 1) f32
    norm = jnp.sqrt(sq_sum) * (dim ** -0.5)
    # Exact reciprocal: HBM-bound kernel -> the precise divide is completely
    # hidden, and we keep full f32 accuracy (approx=True caused mismatches).
    inv = jnp.float32(1.0) / (norm + jnp.float32(eps))    # (block_rows, 1)
    scale = inv * w_ref[...].astype(jnp.float32)          # (block_rows, dim) f32
    if x.dtype == jnp.float32:
        o_ref[...] = (xf * scale).astype(o_ref.dtype)
    else:
        # bf16 path (v6e/v7x have bf16 VALU): cast the per-row scale down once
        # and do the final multiply in the native dtype so the largest live
        # temporary stays half-width.  The reduction above stays in f32.
        o_ref[...] = (x * scale.astype(x.dtype)).astype(o_ref.dtype)


def _pick_block_rows(rows, dim, dtype,
                     block_bytes_cap=2 * 1024 * 1024,
                     target_grid_steps=8):
    """Row-tile size: large enough that the block DMA dwarfs the ~0.35 us/step
    grid overhead, small enough (<= ~2 MiB of I/O per block) that the total
    VMEM footprint (2x in + 2x out double buffers + ~4 f32 temp rows) stays
    well under every generation's per-core VMEM, and split into several grid
    steps so the "parallel" row axis can shard across v7x's two TensorCores."""
    itemsize = jnp.dtype(dtype).itemsize
    sublane = max(8, 32 // itemsize)          # 8 f32, 16 bf16, 32 int8/fp8
    if rows <= sublane:
        return rows                           # full-extent block is always legal
    br_cap = max(1, block_bytes_cap // max(dim * itemsize, 1))
    br_split = pl.cdiv(rows, target_grid_steps)
    br = max(sublane, min(br_cap, br_split))
    br = (br // sublane) * sublane            # sublane-aligned, >= sublane
    return min(br, rows)


def _vmem_limit_bytes():
    """Generation-aware scoped-VMEM limit: ~70% of physical per-core capacity
    (v7x: 64 MiB -> ~44 MiB; v5e/v6e: 128 MiB -> capped at 64 MiB), always
    above the 16/32 MiB default scoped limits."""
    cap = None
    try:
        cap = getattr(pltpu.get_tpu_info(), "vmem_capacity_bytes", None)
    except Exception:
        cap = None
    if not cap:
        cap = 64 * 1024 * 1024                # conservative: v7x per-TC physical
    return max(32 * 1024 * 1024, min(int(cap * 0.7), 64 * 1024 * 1024))


def rmsnorm_pallas(x, weight, eps=1e-6, block_rows=None):
    """x: (..., dim) float array, weight: (dim,).  Returns same shape/dtype as x."""
    orig_shape = x.shape
    dim = orig_shape[-1]
    x2d = x.reshape(-1, dim)
    rows = x2d.shape[0]
    w2d = weight.reshape(1, dim)

    # TODO(synk): for lane-sparse feature dims (dim % 128 != 0, e.g. dim=32
    # here) a lane-folding reshape (128//dim logical rows per physical 128-lane
    # row with a segmented in-kernel reduction) would avoid masked partial
    # stores; real LLM hidden sizes (multiples of 128) already hit the
    # lane-dense fast path.

    if block_rows is None:
        block_rows = _pick_block_rows(rows, dim, x.dtype)
    block_rows = min(block_rows, rows)

    grid = (pl.cdiv(rows, block_rows),)       # ragged last block handled by Pallas

    itemsize = jnp.dtype(x.dtype).itemsize
    w_itemsize = jnp.dtype(weight.dtype).itemsize
    cost = pl.CostEstimate(
        flops=4 * rows * dim,                 # square + reduce + two scale muls
        transcendentals=2 * rows,             # sqrt + reciprocal per row
        bytes_accessed=2 * rows * dim * itemsize + dim * w_itemsize,
    )

    out = pl.pallas_call(
        functools.partial(_rmsnorm_kernel, eps=eps),
        out_shape=jax.ShapeDtypeStruct((rows, dim), x.dtype),
        grid_spec=pltpu.PrefetchScalarGridSpec(
            num_scalar_prefetch=0,
            grid=grid,
            in_specs=[
                pl.BlockSpec((block_rows, dim), lambda i: (i, 0)),
                # Constant block index -> Pallas skips the weight re-DMA after
                # the first step; (1, dim) full-extent block is always legal.
                pl.BlockSpec((1, dim), lambda i: (0, 0)),
            ],
            out_specs=pl.BlockSpec((block_rows, dim), lambda i: (i, 0)),
        ),
        compiler_params=pltpu.CompilerParams(
            # Row axis is embarrassingly parallel -> shards across v7x's 2 TCs.
            dimension_semantics=("parallel",),
            vmem_limit_bytes=_vmem_limit_bytes(),
        ),
        cost_estimate=cost,
    )(x2d, w2d)

    return out.reshape(orig_shape)


def rmsnorm_ref(x, weight, eps=1e-6):
    xf = x.astype(jnp.float32)
    norm = jnp.linalg.norm(xf, axis=-1, keepdims=True) * (x.shape[-1] ** -0.5)
    return xf / (norm + eps) * weight.astype(jnp.float32)


if __name__ == "__main__":
    key = jax.random.PRNGKey(0)
    batch, seq, hidden = 2, 8, 32

    x = jax.random.normal(key, (batch, seq, hidden), dtype=jnp.float32)
    # nn.Parameter(torch.ones(dim)) -> deterministic ones init
    weight = jnp.ones((hidden,), dtype=jnp.float32)

    out = jax.block_until_ready(rmsnorm_pallas(x, weight, eps=1e-6))
    ref = rmsnorm_ref(x, weight, eps=1e-6)
    assert out.shape == x.shape and out.dtype == x.dtype
    # Exact reciprocal path -> tight f32 tolerance.
    assert jnp.allclose(out, ref, atol=1e-5, rtol=1e-5), "mismatch vs reference (f32)"

    # Exercise the ragged (cdiv) last-block path explicitly.
    x2 = jax.random.normal(jax.random.PRNGKey(1), (2, 9, hidden), dtype=jnp.float32)
    out2 = jax.block_until_ready(rmsnorm_pallas(x2, weight, eps=1e-6, block_rows=8))
    ref2 = rmsnorm_ref(x2, weight, eps=1e-6)
    assert jnp.allclose(out2, ref2, atol=1e-5, rtol=1e-5), "mismatch (ragged) vs reference"

    # bf16 path (half-width final multiply) with a lane-dense feature dim.
    hidden_b = 128
    xb = jax.random.normal(jax.random.PRNGKey(2), (2, 8, hidden_b)).astype(jnp.bfloat16)
    wb = jnp.ones((hidden_b,), dtype=jnp.bfloat16)
    outb = jax.block_until_ready(rmsnorm_pallas(xb, wb, eps=1e-6))
    refb = rmsnorm_ref(xb, wb, eps=1e-6)
    assert outb.shape == xb.shape and outb.dtype == jnp.bfloat16
    assert jnp.allclose(outb.astype(jnp.float32), refb, atol=5e-2, rtol=5e-2), \
        "mismatch (bf16) vs reference"

    print("KERNEL_OK")
</pallas_src>

<mosaic_0001>
module attributes {stable_mosaic.version = 11 : i64} {
  func.func @_rmsnorm_kernel(%arg0: i32, %arg1: memref<8x32xf32, #tpu.memory_space<vmem>>, %arg2: memref<1x32xf32, #tpu.memory_space<vmem>>, %arg3: memref<8x32xf32, #tpu.memory_space<vmem>>) attributes {dimension_semantics = [#tpu.dimension_semantics<parallel>], iteration_bounds = array<i64: 2>, scalar_prefetch = 0 : i64, scratch_operands = 0 : i64, tpu.core_type = #tpu.core_type<tc>, window_params = [{transform_indices = @transform_0, window_bounds = array<i64: 8, 32>}, {pipeline_mode = #tpu.pipeline_mode<synchronous>, transform_indices = @transform_1, window_bounds = array<i64: 1, 32>}, {transform_indices = @transform_2, window_bounds = array<i64: 8, 32>}]} {
    %c0 = arith.constant 0 : index
    %c0_0 = arith.constant 0 : index
    %0 = vector.load %arg1[%c0, %c0_0] : memref<8x32xf32, #tpu.memory_space<vmem>>, vector<8x32xf32>
    %1 = arith.mulf %0, %0 : vector<8x32xf32>
    %cst = arith.constant dense<0.000000e+00> : vector<8xf32>
    %2 = vector.multi_reduction <add>, %1, %cst [1] : vector<8x32xf32> to vector<8xf32>
    %3 = vector.shape_cast %2 : vector<8xf32> to vector<8x1xf32>
    %4 = math.sqrt %3 : vector<8x1xf32>
    %cst_1 = arith.constant 0.176776692 : f32
    %5 = vector.broadcast %cst_1 : f32 to vector<8x1xf32>
    %6 = arith.mulf %4, %5 : vector<8x1xf32>
    %cst_2 = arith.constant 9.99999997E-7 : f32
    %7 = vector.broadcast %cst_2 : f32 to vector<8x1xf32>
    %8 = arith.addf %6, %7 : vector<8x1xf32>
    %cst_3 = arith.constant 1.000000e+00 : f32
    %9 = vector.broadcast %cst_3 : f32 to vector<8x1xf32>
    %10 = arith.divf %9, %8 : vector<8x1xf32>
    %c0_4 = arith.constant 0 : index
    %c0_5 = arith.constant 0 : index
    %11 = vector.load %arg2[%c0_4, %c0_5] : memref<1x32xf32, #tpu.memory_space<vmem>>, vector<1x32xf32>
    %12 = vector.broadcast %10 : vector<8x1xf32> to vector<8x32xf32>
    %13 = vector.broadcast %11 : vector<1x32xf32> to vector<8x32xf32>
    %14 = arith.mulf %12, %13 : vector<8x32xf32>
    %15 = arith.mulf %0, %14 : vector<8x32xf32>
    %c0_6 = arith.constant 0 : index
    %c0_7 = arith.constant 0 : index
    %16 = vector.load %arg3[%c0_6, %c0_7] : memref<8x32xf32, #tpu.memory_space<vmem>>, vector<8x32xf32>
    tpu.vector_store %arg3[%c0_6, %c0_7], %15 {strides = array<i32>} : memref<8x32xf32, #tpu.memory_space<vmem>>, vector<8x32xf32>,
    return
  }
  func.func @transform_0(%arg0: i32) -> (i32, i32) {
    %c0_i32 = arith.constant 0 : i32
    %c0_i32_0 = arith.constant 0 : i32
    return %arg0, %c0_i32 : i32, i32
  }
  func.func @transform_1(%arg0: i32) -> (i32, i32) {
    %c0_i32 = arith.constant 0 : i32
    %c0_i32_0 = arith.constant 0 : i32
    %c0_i32_1 = arith.constant 0 : i32
    return %c0_i32, %c0_i32_0 : i32, i32
  }
  func.func @transform_2(%arg0: i32) -> (i32, i32) {
    %c0_i32 = arith.constant 0 : i32
    %c0_i32_0 = arith.constant 0 : i32
    return %arg0, %c0_i32 : i32, i32
  }
}

</mosaic_0001>

<llo_original>
// kernel: tpu_custom_call.1
$region0: #{tpu_custom_call.1}
  #allocation0 [shape = 'u32[]', space=smem, size = 0x4, offset = 0x4, fixed_abs, tag = 'smem constant byte address 0x4 - core index']
  #allocation1 [shape = 'u32[144,128]{1,0:T(1,128)}', space=vmem, size = 0x12000, scoped, tag = 'internal scratch']
  %s0 = inlined_call_operand.hbm [shape: f32[16,32], index: 0, kind: input, shape index: {}]
  %s1 = inlined_call_operand.vmem [shape: f32[1,32], index: 1, kind: input, shape index: {}]
  %s2 = inlined_call_operand.hbm [shape: f32[16,32], index: 2, kind: output, shape index: {}]
  %s3 = sld [smem:[#allocation0]]
  $region45: #{tpu_custom_call.1} parent=0
    _
  %s5 = ssub.s32 1, %s3
  %s6 = scalar_select 0, %s5, %s3
  $region1: #{tpu_custom_call.1} parent=0
    #allocation2 [shape = 'u8[8192]{0}', space=vmem, size = 0x2000, scoped, tag = 'input window, operand 0']
    #allocation3 [shape = 's32[2]{0}', space=sflag, size = 0x8, scoped, tag = 'scoped memory for tpu_custom_call.1']
    #allocation4 [shape = 's32[2]{0}', space=sflag, size = 0x8, scoped, tag = 'scoped memory for tpu_custom_call.1']
    #allocation5 [shape = 'u8[8192]{0}', space=vmem, size = 0x2000, scoped, tag = 'output window, operand 0']
    %7 = vsyncpa [#allocation3], 0
    %s8 = scalar_lea.sflag [#allocation3], 1
    %9 = vsyncpa %s8, 0
    %10 = vsyncpa [#allocation4], 0
    %s11 = scalar_lea.sflag [#allocation4], 1
    %12 = vsyncpa %s11, 0
    loop: start=0, step=1, limit=4
    $region2: #{tpu_custom_call.1} parent=1 // loop_pre_header
      _
    $region3: #{tpu_custom_call.1} parent=1 // loop_header
      %s14 = sphi 0, %s18
      %p15 = scmp.ge.s32.totalorder %s14, 4
      %s24 = sphi 0, %s26
      %s27 = sphi 0, %s24
      %s28 = sphi 0, %s27
      %s44 = sphi 0, %s28
      %s48 = sphi 0, %s48
      %s50 = sphi 0, %s48
      %s51 = sphi 0, %s50
      %s65 = sphi 0, %s51
      %s71 = sphi 0, %s73
      %s74 = sphi 0, %s71
      %s75 = sphi 0, %s74
      %s91 = sphi 0, %s75
    $region4: #{tpu_custom_call.1} parent=1 // loop_header_branch
      %17 = sbr.rel (%p15) target = $region8
    $region5: #{tpu_custom_call.1} parent=1 // loop_body
      %s19 = ssub.s32 %s14, 1
      %s20 = ssub.s32 %s14, 2
      %s21 = sadd.s32 %s14, 1
      %s22 = ssub.s32 %s14, %s21
      %p23 = scmp.eq.s32.totalorder %s22, 0
      %s25 = sadd.s32 %s24, 1
      %s26 = scalar_select %p23, %s24, %s25
      %p29 = pneg %p23
      %p30 = scmp.eq.s32.totalorder %s14, 1
      %p31 = por %p29, %p30
      %p32 = scmp.ne.s32.totalorder %s24, %s27
      %p33 = scmp.eq.s32.totalorder %s14, 0
      %p34 = por %p32, %p33
      %p35 = scmp.ne.s32.totalorder %s24, %s27
      %p36 = scmp.eq.s32.totalorder %s19, 1
      %p37 = por %p35, %p36
      %p38 = scmp.ne.s32.totalorder %s27, %s28
      %p39 = scmp.eq.s32.totalorder %s19, 0
      %p40 = por %p38, %p39
      %p41 = scmp.ne.s32.totalorder %s27, %s28
      %p42 = scmp.eq.s32.totalorder %s20, 1
      %p43 = por %p41, %p42
      %p45 = scmp.ne.s32.totalorder %s28, %s44
      %p46 = scmp.eq.s32.totalorder %s20, 0
      %p47 = por %p45, %p46
      %s49 = sadd.s32 %s48, 1
      %p52 = scmp.eq.s32.totalorder %s14, 1
      %p53 = scmp.ne.s32.totalorder %s48, %s50
      %p54 = scmp.eq.s32.totalorder %s14, 0
      %p55 = por %p53, %p54
      %p56 = scmp.ne.s32.totalorder %s48, %s50
      %p57 = scmp.eq.s32.totalorder %s19, 1
      %p58 = por %p56, %p57
      %p59 = scmp.ne.s32.totalorder %s50, %s51
      %p60 = scmp.eq.s32.totalorder %s19, 0
      %p61 = por %p59, %p60
      %p62 = scmp.ne.s32.totalorder %s50, %s51
      %p63 = scmp.eq.s32.totalorder %s20, 1
      %p64 = por %p62, %p63
      %p66 = scmp.ne.s32.totalorder %s51, %s65
      %p67 = scmp.eq.s32.totalorder %s20, 0
      %p68 = por %p66, %p67
      %s69 = ssub.s32 %s14, %s21
      %p70 = scmp.eq.s32.totalorder %s69, 0
      %s72 = sadd.s32 %s71, 1
      %s73 = scalar_select %p70, %s71, %s72
      %p76 = pneg %p70
      %p77 = scmp.eq.s32.totalorder %s14, 1
      %p78 = por %p76, %p77
      %p79 = scmp.ne.s32.totalorder %s71, %s74
      %p80 = scmp.eq.s32.totalorder %s14, 0
      %p81 = por %p79, %p80
      %p82 = scmp.ne.s32.totalorder %s71, %s74
      %p83 = scmp.eq.s32.totalorder %s19, 1
      %p84 = por %p82, %p83
      %p85 = scmp.ne.s32.totalorder %s74, %s75
      %p86 = scmp.eq.s32.totalorder %s19, 0
      %p87 = por %p85, %p86
      %p88 = scmp.ne.s32.totalorder %s74, %s75
      %p89 = scmp.eq.s32.totalorder %s20, 1
      %p90 = por %p88, %p89
      %p92 = scmp.ne.s32.totalorder %s75, %s91
      %p93 = scmp.eq.s32.totalorder %s20, 0
      %p94 = por %p92, %p93
      %p95 = scmp.le.s32.totalorder 1, %s14
      %p96 = scmp.lt.s32.totalorder %s14, 3
      %p97 = pnand %p95, %p96
      %p98 = pneg %p97
      // Predicated region
      $region9: #{tpu_custom_call.1} parent=5 // pred_check
        _
      $region10: #{tpu_custom_call.1} parent=5 // pred_check_branch
        %100 = sbr.rel (%p97) target = $region12
      $region11: #{tpu_custom_call.1} parent=5 // pred_region
        %s101 = ssub.s32 %s14, 1
        // Predicated region
        $region13: #{tpu_custom_call.1} parent=11 // pred_check
          %p102 = pneg %p61
        $region14: #{tpu_custom_call.1} parent=11 // pred_check_branch
          %104 = sbr.rel (%p102) target = $region16
        $region15: #{tpu_custom_call.1} parent=11 // pred_region
          _
        $region16: #{tpu_custom_call.1} parent=11 // pred_fallthru
          _
      $region12: #{tpu_custom_call.1} parent=5 // pred_fallthru
        _
      %p105 = scmp.lt.s32.totalorder %s14, 2
      // Predicated region
      $region17: #{tpu_custom_call.1} parent=5 // pred_check
        %p106 = pneg %p105
      $region18: #{tpu_custom_call.1} parent=5 // pred_check_branch
        %108 = sbr.rel (%p106) target = $region20
      $region19: #{tpu_custom_call.1} parent=5 // pred_region
        // Predicated region
        $region21: #{tpu_custom_call.1} parent=19 // pred_check
          %p109 = pneg %p34
        $region22: #{tpu_custom_call.1} parent=19 // pred_check_branch
          %111 = sbr.rel (%p109) target = $region24
        $region23: #{tpu_custom_call.1} parent=19 // pred_region
          %s112 = sand.u32 %s24, 1
          %s113 = scalar_lea.sflag [#allocation3], %s112
          %s114 = sand.u32 %s24, 1
          %s115 = smul.addr %s114, 8
          %s116 = scalar_lea.vmem [#allocation2], %s115
          %s118 = ssub.s32 128, 128
          %119 = vsyncadd %s113, %s118
          %s120 = smul.addr %s14, 128
          %s121 = scalar_lea.hbm %s0, %s120
          %s123 = sshll.u32 %s116, 4
          %s124 = int_to_ptr.vmem [resolvable:$true] %s123
          %126 = dma.hbm_to_vmem [thread:$0]  %s121, 128, %s124, %s113
        $region24: #{tpu_custom_call.1} parent=19 // pred_fallthru
          _
      $region20: #{tpu_custom_call.1} parent=5 // pred_fallthru
        _
      %p127 = scmp.le.s32.totalorder 1, %s14
      %p128 = scmp.lt.s32.totalorder %s14, 3
      %p129 = pnand %p127, %p128
      %p130 = pneg %p129
      // Predicated region
      $region25: #{tpu_custom_call.1} parent=5 // pred_check
        _
      $region26: #{tpu_custom_call.1} parent=5 // pred_check_branch
        %132 = sbr.rel (%p129) target = $region28
      $region27: #{tpu_custom_call.1} parent=5 // pred_region
        %s133 = ssub.s32 %s14, 1
        %s134 = sand.u32 %s27, 1
        %s135 = scalar_lea.sflag [#allocation3], %s134
        %s136 = sand.u32 %s27, 1
        %s137 = smul.addr %s136, 8
        %s138 = scalar_lea.vmem [#allocation2], %s137
        // Predicated region
        $region29: #{tpu_custom_call.1} parent=27 // pred_check
          %p139 = pneg %p40
        $region30: #{tpu_custom_call.1} parent=27 // pred_check_branch
          %141 = sbr.rel (%p139) target = $region32
        $region31: #{tpu_custom_call.1} parent=27 // pred_region
          %142 = dma.done %s135, 128
        $region32: #{tpu_custom_call.1} parent=27 // pred_fallthru
          _
        %s143 = sand.u32 %s27, 1
        %s144 = scalar_lea.sflag [#allocation3], %s143
        %s145 = sand.u32 %s27, 1
        %s146 = smul.addr %s145, 8
        %s147 = scalar_lea.vmem [#allocation2], %s146
        %p148 = pneg %p40
        %p149 = pneg %p37
        %p150 = pneg %p61
        %p151 = pneg %p58
        %p152 = pneg %p87
        %p153 = pneg %p84
        %s154 = sand.u32 %s74, 1
        %s155 = scalar_lea.sflag [#allocation4], %s154
        %s156 = sand.u32 %s74, 1
        %s157 = smul.addr %s156, 8
        %s158 = scalar_lea.vmem [#allocation5], %s157
        %v159 = vld [vmem:[%s138] sm:$0xff]
        %v160 = vmul.f32 %v159, %v159
        %vm161 = vcmask 261120
        %v162 = vsel %vm161, %v160, 0.0
        %163 = vadd.xlane.f32.xlu0 %v162
        %v164 = vpop.xlane.xlu0 %163
        %v165 = vrsqrt.pop %v164
        %v166 = vmul.f32 %v164, %v165
        %vm167 = vcmp.eq.f32.partialorder %v164, inf
        %v168 = vsel %vm167, %v164, %v166
        %vm169 = vcmp.eq.f32.partialorder %v164, 0.0
        %v170 = vand.u32 %v164, 2147483648
        %v171 = vsel %vm169, %v170, %v168
        %v172 = vmul.f32 %v171, 0.17677669
        %v173 = vadd.f32 %v172, 1e-06
        %v174 = vrcp.pop %v173
        %v175 = vmul.f32 1.0, %v174
        %v176 = vld [vmem:[%s1] sm:$0x1]
        %v178 = vlaneseq
        %v179 = vshrl.u32 %v178, 7
        %v180 = vsub.s32 0, %v179
        %v181 = vrot.slane %v176, %v180
        %v183 = vmul.f32 %v175, %v181
        %v184 = vmul.f32 %v159, %v183
        %185 = vst.msk [vmem:[%s158] sm:$0xff] %vm161, %v184
        %s186 = sand.u32 %s74, 1
        %s187 = scalar_lea.sflag [#allocation4], %s186
        %s188 = sand.u32 %s74, 1
        %s189 = smul.addr %s188, 8
        %s190 = scalar_lea.vmem [#allocation5], %s189
        // Predicated region
        $region33: #{tpu_custom_call.1} parent=27 // pred_check
          %p191 = pneg %p84
        $region34: #{tpu_custom_call.1} parent=27 // pred_check_branch
          %193 = sbr.rel (%p191) target = $region36
        $region35: #{tpu_custom_call.1} parent=27 // pred_region
          %s195 = ssub.s32 128, 128
          %196 = vsyncadd %s187, %s195
          %s197 = smul.addr %s19, 128
          %s198 = scalar_lea.hbm %s2, %s197
          %s200 = sshll.u32 %s190, 4
          %s201 = int_to_ptr.vmem [resolvable:$true] %s200
          %203 = dma.vmem_to_hbm [thread:$0]  %s201, 128, %s198, %s187
        $region36: #{tpu_custom_call.1} parent=27 // pred_fallthru
          _
      $region28: #{tpu_custom_call.1} parent=5 // pred_fallthru
        _
      %p204 = scmp.le.s32.totalorder 2, %s14
      // Predicated region
      $region37: #{tpu_custom_call.1} parent=5 // pred_check
        %p205 = pneg %p204
      $region38: #{tpu_custom_call.1} parent=5 // pred_check_branch
        %207 = sbr.rel (%p205) target = $region40
      $region39: #{tpu_custom_call.1} parent=5 // pred_region
        %s208 = ssub.s32 %s14, 2
        // Predicated region
        $region41: #{tpu_custom_call.1} parent=39 // pred_check
          %p209 = pneg %p90
        $region42: #{tpu_custom_call.1} parent=39 // pred_check_branch
          %211 = sbr.rel (%p209) target = $region44
        $region43: #{tpu_custom_call.1} parent=39 // pred_region
          %s212 = sand.u32 %s75, 1
          %s213 = scalar_lea.sflag [#allocation4], %s212
          %s214 = sand.u32 %s75, 1
          %s215 = smul.addr %s214, 8
          %s216 = scalar_lea.vmem [#allocation5], %s215
          %217 = dma.done %s213, 128
        $region44: #{tpu_custom_call.1} parent=39 // pred_fallthru
          _
      $region40: #{tpu_custom_call.1} parent=5 // pred_fallthru
        _
    $region6: #{tpu_custom_call.1} parent=1 // loop_footer
      %s18 = sadd.s32 1, %s14
    $region7: #{tpu_custom_call.1} parent=1 // loop_footer_branch
      %13 = sbr.rel target = $region3
    $region8: #{tpu_custom_call.1} parent=1 // loop_exit
      _
    %218 = vsyncpa [#allocation3], 1
    %s219 = scalar_lea.sflag [#allocation3], 1
    %220 = vsyncpa %s219, 1
    %221 = vsyncpa [#allocation4], 1
    %s222 = scalar_lea.sflag [#allocation4], 1
    %223 = vsyncpa %s222, 1

</llo_original>
